<compile_context>
chip_gen: v5e
topology: v5e:2x2
jax: 0.10.0
libtpu: 0.0.40
codegen_flags: <defaults>
</compile_context>

<pallas_src>
import functools

import jax
import jax.numpy as jnp
from jax.experimental import pallas as pl
from jax.experimental.pallas import tpu as pltpu


def _round_up(n, m):
    return ((n + m - 1) // m) * m


_TILE_B_MAX = 1024                       # rows per grid step at large batch
_VMEM_LIMIT_BYTES = 32 * 1024 * 1024     # explicit scoped-VMEM limit (safe on v5e/v6e/v7x)


def _full_reco_kernel(x_ref, w1_ref, b1_ref, w2_ref, b2_ref, w3_ref, b3_ref, o_ref):
    # x_ref: (TILE_B, IN_PAD) bf16 ; weights bf16 ; biases f32 ; o_ref bf16 (or f32).
    x = x_ref[...]

    # lin1 + ReLU  (MXU bf16 matmul, f32 accumulate)
    h1 = jnp.dot(x, w1_ref[...], preferred_element_type=jnp.float32) + b1_ref[...]
    h1 = jnp.maximum(h1, 0.0).astype(jnp.bfloat16)

    # lin2 + ReLU
    h2 = jnp.dot(h1, w2_ref[...], preferred_element_type=jnp.float32) + b2_ref[...]
    h2 = jnp.maximum(h2, 0.0).astype(jnp.bfloat16)

    # lin3 (no activation), single narrowing cast on store
    out = jnp.dot(h2, w3_ref[...], preferred_element_type=jnp.float32) + b3_ref[...]
    o_ref[...] = out.astype(o_ref.dtype)


def prepare_params(params, input_size):
    """One-time pad/cast of the weights. Call once and reuse across forward calls."""
    w1, b1, w2, b2, w3, b3 = params
    hidden_dim = w1.shape[1]
    assert hidden_dim % 128 == 0, "hidden_dim must be a multiple of 128 for lane alignment"

    in_pad = _round_up(input_size, 128)            # e.g. 205 -> 256 (exact zero K-pad)
    w1_p = jnp.zeros((in_pad, hidden_dim), jnp.bfloat16)
    w1_p = w1_p.at[:input_size, :].set(w1.astype(jnp.bfloat16))

    return (
        w1_p,
        b1.reshape(1, -1).astype(jnp.float32),
        w2.astype(jnp.bfloat16),
        b2.reshape(1, -1).astype(jnp.float32),
        w3.astype(jnp.bfloat16),                   # (hidden, 784): no column padding
        b3.reshape(1, -1).astype(jnp.float32),     # (1, 784)
    )


@functools.partial(jax.jit, static_argnums=(2, 3, 4))
def _forward_impl(x, prepared, input_size, output_dim, out_dtype):
    w1_p, b1_p, w2_p, b2_p, w3_p, b3_p = prepared
    in_pad, hidden_dim = w1_p.shape

    x2d = x.reshape(-1, input_size).astype(jnp.bfloat16)   # direct bf16 cast
    batch = x2d.shape[0]

    # ---- batch tiling: 16-row multiples (bf16 sublanes), grid >= 2 when possible ----
    padded_batch = _round_up(max(batch, 16), 16)
    if padded_batch <= 16:
        tile_b = padded_batch                       # tiny batch: single 16-row tile
    elif padded_batch <= 2 * _TILE_B_MAX:
        padded_batch = _round_up(padded_batch, 32)
        tile_b = padded_batch // 2                  # 2 tiles -> pipelining + 2 TCs on v7x
    else:
        tile_b = _TILE_B_MAX
        padded_batch = _round_up(batch, tile_b)
    grid = (padded_batch // tile_b,)

    # Pad the activations only (weights already prepared out of the hot path).
    x_p = jnp.zeros((padded_batch, in_pad), jnp.bfloat16)
    x_p = x_p.at[:batch, :input_size].set(x2d)

    # BlockSpecs: x/out tiled over batch; weights/biases resident (constant index_map).
    x_spec = pl.BlockSpec((tile_b, in_pad), lambda i: (i, 0))
    w1_spec = pl.BlockSpec((in_pad, hidden_dim), lambda i: (0, 0))
    b1_spec = pl.BlockSpec((1, hidden_dim), lambda i: (0, 0))
    w2_spec = pl.BlockSpec((hidden_dim, hidden_dim), lambda i: (0, 0))
    b2_spec = pl.BlockSpec((1, hidden_dim), lambda i: (0, 0))
    w3_spec = pl.BlockSpec((hidden_dim, output_dim), lambda i: (0, 0))
    b3_spec = pl.BlockSpec((1, output_dim), lambda i: (0, 0))
    out_spec = pl.BlockSpec((tile_b, output_dim), lambda i: (i, 0))

    flops = 2 * padded_batch * (in_pad * hidden_dim
                                + hidden_dim * hidden_dim
                                + hidden_dim * output_dim)
    out_itemsize = jnp.dtype(out_dtype).itemsize
    bytes_accessed = (x_p.size * 2
                      + (w1_p.size + w2_p.size + w3_p.size) * 2
                      + (b1_p.size + b2_p.size + b3_p.size) * 4
                      + padded_batch * output_dim * out_itemsize)

    out2d = pl.pallas_call(
        _full_reco_kernel,
        out_shape=jax.ShapeDtypeStruct((padded_batch, output_dim), out_dtype),
        grid=grid,
        in_specs=[x_spec, w1_spec, b1_spec, w2_spec, b2_spec, w3_spec, b3_spec],
        out_specs=out_spec,
        compiler_params=pltpu.CompilerParams(
            dimension_semantics=("parallel",),
            vmem_limit_bytes=_VMEM_LIMIT_BYTES,
        ),
        cost_estimate=pl.CostEstimate(
            flops=flops, transcendentals=0, bytes_accessed=bytes_accessed),
    )(x_p, w1_p, b1_p, w2_p, b2_p, w3_p, b3_p)

    if padded_batch != batch:
        out2d = out2d[:batch]                       # row slice only (no column copy)
    return out2d.reshape(-1, 1, 28, 28)


def full_reco_net(x, prepared_params, input_size, output_dim=28 * 28,
                  out_dtype=jnp.bfloat16):
    """Forward pass of FullRecoNet. x may have any leading shape (flattened like x.view).
    Output dtype defaults to bf16 (memory-bound kernel); pass jnp.float32 if needed."""
    return _forward_impl(x, prepared_params, input_size, output_dim, out_dtype)


def init_params(key, input_size, hidden_dim, output_dim):
    """Deterministic parameter init mirroring nn.Linear shapes.
    Weights stored transposed relative to PyTorch: (in_features, out_features)."""
    ks = jax.random.split(key, 6)

    def linear(kw, kb, fan_in, fan_out):
        bound = 1.0 / jnp.sqrt(fan_in)
        w = jax.random.uniform(kw, (fan_in, fan_out), jnp.float32, -bound, bound)
        b = jax.random.uniform(kb, (1, fan_out), jnp.float32, -bound, bound)
        return w, b

    w1, b1 = linear(ks[0], ks[1], input_size, hidden_dim)
    w2, b2 = linear(ks[2], ks[3], hidden_dim, hidden_dim)
    w3, b3 = linear(ks[4], ks[5], hidden_dim, output_dim)
    return (w1, b1, w2, b2, w3, b3)


def _reference_bf16(x, params, input_size):
    """Pure-JAX reference using the same bf16-input / f32-accumulate arithmetic."""
    w1, b1, w2, b2, w3, b3 = params

    def mm(a, w):
        return jnp.dot(a.astype(jnp.bfloat16), w.astype(jnp.bfloat16),
                       preferred_element_type=jnp.float32)

    h = x.reshape(-1, input_size)
    h = jnp.maximum(mm(h, w1) + b1, 0.0)
    h = jnp.maximum(mm(h, w2) + b2, 0.0)
    h = mm(h, w3) + b3
    return h.reshape(-1, 1, 28, 28)


def _reference_f32(x, params, input_size):
    """Pure-f32 reference (semantics check, loose tolerance vs bf16 kernel)."""
    w1, b1, w2, b2, w3, b3 = params
    h = x.reshape(-1, input_size)
    h = jnp.maximum(h @ w1 + b1, 0.0)
    h = jnp.maximum(h @ w2 + b2, 0.0)
    h = h @ w3 + b3
    return h.reshape(-1, 1, 28, 28)


if __name__ == "__main__":
    # Small shapes consistent with the module docstring: input 5*41 = 205.
    input_size = 5 * 41
    hidden_dim = 256
    output_dim = 28 * 28

    key = jax.random.PRNGKey(0)
    k_x, k_p, k_x2 = jax.random.split(key, 3)

    params = init_params(k_p, input_size, hidden_dim, output_dim)
    prepared = prepare_params(params, input_size)     # one-time pad/cast of weights

    # ---- small-batch case (single 16-row tile) ----
    x = jax.random.normal(k_x, (2, 5, 41), jnp.float32)   # raw (B, 5, 41); forward flattens
    out = jax.block_until_ready(full_reco_net(x, prepared, input_size, output_dim))
    assert out.shape == (2, 1, 28, 28), out.shape

    ref_bf16 = _reference_bf16(x, params, input_size)
    assert jnp.allclose(out.astype(jnp.float32), ref_bf16, atol=5e-2, rtol=5e-2), \
        "mismatch vs bf16 reference"

    ref_f32 = _reference_f32(x, params, input_size)
    assert jnp.allclose(out.astype(jnp.float32), ref_f32, atol=1.5e-1, rtol=1.5e-1), \
        "mismatch vs f32 reference"

    # ---- multi-tile case (grid length 2) to exercise pipelining / megacore path ----
    x2 = jax.random.normal(k_x2, (40, 5, 41), jnp.float32)
    out2 = jax.block_until_ready(full_reco_net(x2, prepared, input_size, output_dim))
    assert out2.shape == (40, 1, 28, 28), out2.shape
    ref2 = _reference_bf16(x2, params, input_size)
    assert jnp.allclose(out2.astype(jnp.float32), ref2, atol=5e-2, rtol=5e-2), \
        "mismatch vs bf16 reference (batch=40)"

    print("KERNEL_OK")
</pallas_src>

<mosaic_0001>
module attributes {stable_mosaic.version = 11 : i64} {
  func.func @_full_reco_kernel(%arg0: i32, %arg1: memref<16x256xbf16, #tpu.memory_space<vmem>>, %arg2: memref<256x256xbf16, #tpu.memory_space<vmem>>, %arg3: memref<1x256xf32, #tpu.memory_space<vmem>>, %arg4: memref<256x256xbf16, #tpu.memory_space<vmem>>, %arg5: memref<1x256xf32, #tpu.memory_space<vmem>>, %arg6: memref<256x784xbf16, #tpu.memory_space<vmem>>, %arg7: memref<1x784xf32, #tpu.memory_space<vmem>>, %arg8: memref<16x784xbf16, #tpu.memory_space<vmem>>) attributes {dimension_semantics = [#tpu.dimension_semantics<parallel>], iteration_bounds = array<i64: 1>, scalar_prefetch = 0 : i64, scratch_operands = 0 : i64, tpu.core_type = #tpu.core_type<tc>, window_params = [{transform_indices = @transform_0, window_bounds = array<i64: 16, 256>}, {pipeline_mode = #tpu.pipeline_mode<synchronous>, transform_indices = @transform_1, window_bounds = array<i64: 256, 256>}, {pipeline_mode = #tpu.pipeline_mode<synchronous>, transform_indices = @transform_2, window_bounds = array<i64: 1, 256>}, {pipeline_mode = #tpu.pipeline_mode<synchronous>, transform_indices = @transform_3, window_bounds = array<i64: 256, 256>}, {pipeline_mode = #tpu.pipeline_mode<synchronous>, transform_indices = @transform_4, window_bounds = array<i64: 1, 256>}, {pipeline_mode = #tpu.pipeline_mode<synchronous>, transform_indices = @transform_5, window_bounds = array<i64: 256, 784>}, {pipeline_mode = #tpu.pipeline_mode<synchronous>, transform_indices = @transform_6, window_bounds = array<i64: 1, 784>}, {transform_indices = @transform_7, window_bounds = array<i64: 16, 784>}]} {
    %c0 = arith.constant 0 : index
    %c0_0 = arith.constant 0 : index
    %0 = vector.load %arg1[%c0, %c0_0] : memref<16x256xbf16, #tpu.memory_space<vmem>>, vector<16x256xbf16>
    %c0_1 = arith.constant 0 : index
    %c0_2 = arith.constant 0 : index
    %1 = vector.load %arg2[%c0_1, %c0_2] : memref<256x256xbf16, #tpu.memory_space<vmem>>, vector<256x256xbf16>
    %cst = arith.constant dense<0.000000e+00> : vector<16x256xf32>
    %2 = tpu.matmul %0, %1, %cst {dimension_numbers = #tpu.dot_dimension_numbers<[1], [0], [0], [1], [0, 0, 1, 1], [], []>} : vector<16x256xbf16>, vector<256x256xbf16>, vector<16x256xf32> -> vector<16x256xf32>
    %c0_3 = arith.constant 0 : index
    %c0_4 = arith.constant 0 : index
    %3 = vector.load %arg3[%c0_3, %c0_4] : memref<1x256xf32, #tpu.memory_space<vmem>>, vector<1x256xf32>
    %4 = vector.broadcast %3 : vector<1x256xf32> to vector<16x256xf32>
    %5 = arith.addf %2, %4 : vector<16x256xf32>
    %cst_5 = arith.constant 0.000000e+00 : f32
    %6 = vector.broadcast %cst_5 : f32 to vector<16x256xf32>
    %7 = arith.maximumf %5, %6 : vector<16x256xf32>
    %8 = arith.truncf %7 : vector<16x256xf32> to vector<16x256xbf16>
    %c0_6 = arith.constant 0 : index
    %c0_7 = arith.constant 0 : index
    %9 = vector.load %arg4[%c0_6, %c0_7] : memref<256x256xbf16, #tpu.memory_space<vmem>>, vector<256x256xbf16>
    %cst_8 = arith.constant dense<0.000000e+00> : vector<16x256xf32>
    %10 = tpu.matmul %8, %9, %cst_8 {dimension_numbers = #tpu.dot_dimension_numbers<[1], [0], [0], [1], [0, 0, 1, 1], [], []>} : vector<16x256xbf16>, vector<256x256xbf16>, vector<16x256xf32> -> vector<16x256xf32>
    %c0_9 = arith.constant 0 : index
    %c0_10 = arith.constant 0 : index
    %11 = vector.load %arg5[%c0_9, %c0_10] : memref<1x256xf32, #tpu.memory_space<vmem>>, vector<1x256xf32>
    %12 = vector.broadcast %11 : vector<1x256xf32> to vector<16x256xf32>
    %13 = arith.addf %10, %12 : vector<16x256xf32>
    %cst_11 = arith.constant 0.000000e+00 : f32
    %14 = vector.broadcast %cst_11 : f32 to vector<16x256xf32>
    %15 = arith.maximumf %13, %14 : vector<16x256xf32>
    %16 = arith.truncf %15 : vector<16x256xf32> to vector<16x256xbf16>
    %c0_12 = arith.constant 0 : index
    %c0_13 = arith.constant 0 : index
    %17 = vector.load %arg6[%c0_12, %c0_13] : memref<256x784xbf16, #tpu.memory_space<vmem>>, vector<256x784xbf16>
    %cst_14 = arith.constant dense<0.000000e+00> : vector<16x784xf32>
    %18 = tpu.matmul %16, %17, %cst_14 {dimension_numbers = #tpu.dot_dimension_numbers<[1], [0], [0], [1], [0, 0, 1, 1], [], []>} : vector<16x256xbf16>, vector<256x784xbf16>, vector<16x784xf32> -> vector<16x784xf32>
    %c0_15 = arith.constant 0 : index
    %c0_16 = arith.constant 0 : index
    %19 = vector.load %arg7[%c0_15, %c0_16] : memref<1x784xf32, #tpu.memory_space<vmem>>, vector<1x784xf32>
    %20 = vector.broadcast %19 : vector<1x784xf32> to vector<16x784xf32>
    %21 = arith.addf %18, %20 : vector<16x784xf32>
    %22 = arith.truncf %21 : vector<16x784xf32> to vector<16x784xbf16>
    %c0_17 = arith.constant 0 : index
    %c0_18 = arith.constant 0 : index
    %23 = vector.load %arg8[%c0_17, %c0_18] : memref<16x784xbf16, #tpu.memory_space<vmem>>, vector<16x784xbf16>
    tpu.vector_store %arg8[%c0_17, %c0_18], %22 {strides = array<i32>} : memref<16x784xbf16, #tpu.memory_space<vmem>>, vector<16x784xbf16>,
    return
  }
  func.func @transform_0(%arg0: i32) -> (i32, i32) {
    %c0_i32 = arith.constant 0 : i32
    %c0_i32_0 = arith.constant 0 : i32
    return %arg0, %c0_i32 : i32, i32
  }
  func.func @transform_1(%arg0: i32) -> (i32, i32) {
    %c0_i32 = arith.constant 0 : i32
    %c0_i32_0 = arith.constant 0 : i32
    %c0_i32_1 = arith.constant 0 : i32
    return %c0_i32, %c0_i32_0 : i32, i32
  }
  func.func @transform_2(%arg0: i32) -> (i32, i32) {
    %c0_i32 = arith.constant 0 : i32
    %c0_i32_0 = arith.constant 0 : i32
    %c0_i32_1 = arith.constant 0 : i32
    return %c0_i32, %c0_i32_0 : i32, i32
  }
  func.func @transform_3(%arg0: i32) -> (i32, i32) {
    %c0_i32 = arith.constant 0 : i32
    %c0_i32_0 = arith.constant 0 : i32
    %c0_i32_1 = arith.constant 0 : i32
    return %c0_i32, %c0_i32_0 : i32, i32
  }
  func.func @transform_4(%arg0: i32) -> (i32, i32) {
    %c0_i32 = arith.constant 0 : i32
    %c0_i32_0 = arith.constant 0 : i32
    %c0_i32_1 = arith.constant 0 : i32
    return %c0_i32, %c0_i32_0 : i32, i32
  }
  func.func @transform_5(%arg0: i32) -> (i32, i32) {
    %c0_i32 = arith.constant 0 : i32
    %c0_i32_0 = arith.constant 0 : i32
    %c0_i32_1 = arith.constant 0 : i32
    return %c0_i32, %c0_i32_0 : i32, i32
  }
  func.func @transform_6(%arg0: i32) -> (i32, i32) {
    %c0_i32 = arith.constant 0 : i32
    %c0_i32_0 = arith.constant 0 : i32
    %c0_i32_1 = arith.constant 0 : i32
    return %c0_i32, %c0_i32_0 : i32, i32
  }
  func.func @transform_7(%arg0: i32) -> (i32, i32) {
    %c0_i32 = arith.constant 0 : i32
    %c0_i32_0 = arith.constant 0 : i32
    return %arg0, %c0_i32 : i32, i32
  }
}

</mosaic_0001>

<llo_original>
// kernel: _forward_impl.1
$region0: #{_forward_impl.1}
  #allocation0 [shape = 'u32[]', space=smem, size = 0x4, offset = 0x4, fixed_abs, tag = 'smem constant byte address 0x4 - core index']
  #allocation1 [shape = 'u32[72,128]{1,0:T(1,128)}', space=vmem, size = 0x9000, scoped, tag = 'internal scratch']
  %s0 = inlined_call_operand.vmem [shape: bf16[16,256], index: 0, kind: input, shape index: {}]
  %s1 = inlined_call_operand.vmem [shape: bf16[256,256], index: 1, kind: input, shape index: {}]
  %s2 = inlined_call_operand.vmem [shape: f32[1,256], index: 2, kind: input, shape index: {}]
  %s3 = inlined_call_operand.vmem [shape: bf16[256,256], index: 3, kind: input, shape index: {}]
  %s4 = inlined_call_operand.vmem [shape: f32[1,256], index: 4, kind: input, shape index: {}]
  %s5 = inlined_call_operand.vmem [shape: bf16[256,784], index: 5, kind: input, shape index: {}]
  %s6 = inlined_call_operand.vmem [shape: f32[1,784], index: 6, kind: input, shape index: {}]
  %s7 = inlined_call_operand.vmem [shape: bf16[16,784], index: 7, kind: output, shape index: {}]
  %s8 = sld [smem:[#allocation0]]
  $region38: #{_forward_impl.1} parent=0
    _
  %s10 = ssub.s32 1, %s8
  %s11 = scalar_select 0, %s10, %s8
  // Predicated region
  $region2: #{_forward_impl.1} parent=0 // pred_check
    _
  $region3: #{_forward_impl.1} parent=0 // pred_check_branch
    %13 = sbr.rel (0) target = $region5
  $region4: #{_forward_impl.1} parent=0 // pred_region
    _
  $region5: #{_forward_impl.1} parent=0 // pred_fallthru
    _
  // Predicated region
  $region6: #{_forward_impl.1} parent=0 // pred_check
    _
  $region7: #{_forward_impl.1} parent=0 // pred_check_branch
    %15 = sbr.rel (0) target = $region9
  $region8: #{_forward_impl.1} parent=0 // pred_region
    _
  $region9: #{_forward_impl.1} parent=0 // pred_fallthru
    _
  // Predicated region
  $region10: #{_forward_impl.1} parent=0 // pred_check
    _
  $region11: #{_forward_impl.1} parent=0 // pred_check_branch
    %17 = sbr.rel (0) target = $region13
  $region12: #{_forward_impl.1} parent=0 // pred_region
    _
  $region13: #{_forward_impl.1} parent=0 // pred_fallthru
    _
  // Predicated region
  $region14: #{_forward_impl.1} parent=0 // pred_check
    _
  $region15: #{_forward_impl.1} parent=0 // pred_check_branch
    %19 = sbr.rel (0) target = $region17
  $region16: #{_forward_impl.1} parent=0 // pred_region
    _
  $region17: #{_forward_impl.1} parent=0 // pred_fallthru
    _
  // Predicated region
  $region18: #{_forward_impl.1} parent=0 // pred_check
    _
  $region19: #{_forward_impl.1} parent=0 // pred_check_branch
    %21 = sbr.rel (0) target = $region21
  $region20: #{_forward_impl.1} parent=0 // pred_region
    _
  $region21: #{_forward_impl.1} parent=0 // pred_fallthru
    _
  // Predicated region
  $region22: #{_forward_impl.1} parent=0 // pred_check
    _
  $region23: #{_forward_impl.1} parent=0 // pred_check_branch
    %23 = sbr.rel (0) target = $region25
  $region24: #{_forward_impl.1} parent=0 // pred_region
    _
  $region25: #{_forward_impl.1} parent=0 // pred_fallthru
    _
  // Predicated region
  $region26: #{_forward_impl.1} parent=0 // pred_check
    _
  $region27: #{_forward_impl.1} parent=0 // pred_check_branch
    %25 = sbr.rel (0) target = $region29
  $region28: #{_forward_impl.1} parent=0 // pred_region
    _
  $region29: #{_forward_impl.1} parent=0 // pred_fallthru
    _
  %v26 = vld [vmem:[%s0] sm:$0xff]
  %v27 = vld [vmem:[%s0 + $0x8] sm:$0xff]
  %v28 = vld [vmem:[%s1] sm:$0xff]
  %v29 = vld [vmem:[%s1 + $0x8] sm:$0xff]
  %v30 = vld [vmem:[%s1 + $0x10] sm:$0xff]
  %v31 = vld [vmem:[%s1 + $0x18] sm:$0xff]
  %v32 = vld [vmem:[%s1 + $0x20] sm:$0xff]
  %v33 = vld [vmem:[%s1 + $0x28] sm:$0xff]
  %v34 = vld [vmem:[%s1 + $0x30] sm:$0xff]
  %v35 = vld [vmem:[%s1 + $0x38] sm:$0xff]
  %v36 = vld [vmem:[%s1 + $0x40] sm:$0xff]
  %v37 = vld [vmem:[%s1 + $0x48] sm:$0xff]
  %v38 = vld [vmem:[%s1 + $0x50] sm:$0xff]
  %v39 = vld [vmem:[%s1 + $0x58] sm:$0xff]
  %v40 = vld [vmem:[%s1 + $0x60] sm:$0xff]
  %v41 = vld [vmem:[%s1 + $0x68] sm:$0xff]
  %v42 = vld [vmem:[%s1 + $0x70] sm:$0xff]
  %v43 = vld [vmem:[%s1 + $0x78] sm:$0xff]
  %v44 = vld [vmem:[%s1 + $0x80] sm:$0xff]
  %v45 = vld [vmem:[%s1 + $0x88] sm:$0xff]
  %v46 = vld [vmem:[%s1 + $0x90] sm:$0xff]
  %v47 = vld [vmem:[%s1 + $0x98] sm:$0xff]
  %v48 = vld [vmem:[%s1 + $0xa0] sm:$0xff]
  %v49 = vld [vmem:[%s1 + $0xa8] sm:$0xff]
  %v50 = vld [vmem:[%s1 + $0xb0] sm:$0xff]
  %v51 = vld [vmem:[%s1 + $0xb8] sm:$0xff]
  %v52 = vld [vmem:[%s1 + $0xc0] sm:$0xff]
  %v53 = vld [vmem:[%s1 + $0xc8] sm:$0xff]
  %v54 = vld [vmem:[%s1 + $0xd0] sm:$0xff]
  %v55 = vld [vmem:[%s1 + $0xd8] sm:$0xff]
  %v56 = vld [vmem:[%s1 + $0xe0] sm:$0xff]
  %v57 = vld [vmem:[%s1 + $0xe8] sm:$0xff]
  %v58 = vld [vmem:[%s1 + $0xf0] sm:$0xff]
  %v59 = vld [vmem:[%s1 + $0xf8] sm:$0xff]
  %v60 = vld [vmem:[%s2] sm:$0x3]
  %v62 = vperm.slane %v60, 0
  %v63 = vperm.slane %v60, 1
  %v68 = vunpack.c.l.b16 %v26
  %v69 = vunpack.c.h.b16 %v26
  %v70 = vunpack.c.l.b16 %v27
  %v71 = vunpack.c.h.b16 %v27
  %v72 = vpack.c.b16 %v70, %v68
  %v73 = vpack.c.b16 %v71, %v69
  %v108 = vunpack.c.l.b16 %v28
  %v109 = vunpack.c.h.b16 %v28
  %v110 = vunpack.c.l.b16 %v29
  %v111 = vunpack.c.h.b16 %v29
  %v112 = vunpack.c.l.b16 %v30
  %v113 = vunpack.c.h.b16 %v30
  %v114 = vunpack.c.l.b16 %v31
  %v115 = vunpack.c.h.b16 %v31
  %v116 = vunpack.c.l.b16 %v32
  %v117 = vunpack.c.h.b16 %v32
  %v118 = vunpack.c.l.b16 %v33
  %v119 = vunpack.c.h.b16 %v33
  %v120 = vunpack.c.l.b16 %v34
  %v121 = vunpack.c.h.b16 %v34
  %v122 = vunpack.c.l.b16 %v35
  %v123 = vunpack.c.h.b16 %v35
  %v124 = vunpack.c.l.b16 %v36
  %v125 = vunpack.c.h.b16 %v36
  %v126 = vunpack.c.l.b16 %v37
  %v127 = vunpack.c.h.b16 %v37
  %v128 = vunpack.c.l.b16 %v38
  %v129 = vunpack.c.h.b16 %v38
  %v130 = vunpack.c.l.b16 %v39
  %v131 = vunpack.c.h.b16 %v39
  %v132 = vunpack.c.l.b16 %v40
  %v133 = vunpack.c.h.b16 %v40
  %v134 = vunpack.c.l.b16 %v41
  %v135 = vunpack.c.h.b16 %v41
  %v136 = vunpack.c.l.b16 %v42
  %v137 = vunpack.c.h.b16 %v42
  %v138 = vunpack.c.l.b16 %v43
  %v139 = vunpack.c.h.b16 %v43
  %v140 = vunpack.c.l.b16 %v44
  %v141 = vunpack.c.h.b16 %v44
  %v142 = vunpack.c.l.b16 %v45
  %v143 = vunpack.c.h.b16 %v45
  %v144 = vunpack.c.l.b16 %v46
  %v145 = vunpack.c.h.b16 %v46
  %v146 = vunpack.c.l.b16 %v47
  %v147 = vunpack.c.h.b16 %v47
  %v148 = vunpack.c.l.b16 %v48
  %v149 = vunpack.c.h.b16 %v48
  %v150 = vunpack.c.l.b16 %v49
  %v151 = vunpack.c.h.b16 %v49
  %v152 = vunpack.c.l.b16 %v50
  %v153 = vunpack.c.h.b16 %v50
  %v154 = vunpack.c.l.b16 %v51
  %v155 = vunpack.c.h.b16 %v51
  %v156 = vunpack.c.l.b16 %v52
  %v157 = vunpack.c.h.b16 %v52
  %v158 = vunpack.c.l.b16 %v53
  %v159 = vunpack.c.h.b16 %v53
  %v160 = vunpack.c.l.b16 %v54
  %v161 = vunpack.c.h.b16 %v54
  %v162 = vunpack.c.l.b16 %v55
  %v163 = vunpack.c.h.b16 %v55
  %v164 = vunpack.c.l.b16 %v56
  %v165 = vunpack.c.h.b16 %v56
  %v166 = vunpack.c.l.b16 %v57
  %v167 = vunpack.c.h.b16 %v57
  %v168 = vunpack.c.l.b16 %v58
  %v169 = vunpack.c.h.b16 %v58
  %v170 = vunpack.c.l.b16 %v59
  %v171 = vunpack.c.h.b16 %v59
  %v172 = vpack.c.b16 %v110, %v108
  %v173 = vpack.c.b16 %v111, %v109
  %v174 = vpack.c.b16 %v114, %v112
  %v175 = vpack.c.b16 %v115, %v113
  %v176 = vpack.c.b16 %v118, %v116
  %v177 = vpack.c.b16 %v119, %v117
  %v178 = vpack.c.b16 %v122, %v120
  %v179 = vpack.c.b16 %v123, %v121
  %v180 = vpack.c.b16 %v126, %v124
  %v181 = vpack.c.b16 %v127, %v125
  %v182 = vpack.c.b16 %v130, %v128
  %v183 = vpack.c.b16 %v131, %v129
  %v184 = vpack.c.b16 %v134, %v132
  %v185 = vpack.c.b16 %v135, %v133
  %v186 = vpack.c.b16 %v138, %v136
  %v187 = vpack.c.b16 %v139, %v137
  %v188 = vpack.c.b16 %v142, %v140
  %v189 = vpack.c.b16 %v143, %v141
  %v190 = vpack.c.b16 %v146, %v144
  %v191 = vpack.c.b16 %v147, %v145
  %v192 = vpack.c.b16 %v150, %v148
  %v193 = vpack.c.b16 %v151, %v149
  %v194 = vpack.c.b16 %v154, %v152
  %v195 = vpack.c.b16 %v155, %v153
  %v196 = vpack.c.b16 %v158, %v156
  %v197 = vpack.c.b16 %v159, %v157
  %v198 = vpack.c.b16 %v162, %v160
  %v199 = vpack.c.b16 %v163, %v161
  %v200 = vpack.c.b16 %v166, %v164
  %v201 = vpack.c.b16 %v167, %v165
  %v202 = vpack.c.b16 %v170, %v168
  %v203 = vpack.c.b16 %v171, %v169
  %236 = vmatpush.bf16.msra.mxu0 %v186
  %237 = vmatpush.bf16.msra.mxu0 %v184
  %238 = vmatpush.bf16.msra.mxu0 %v182
  %239 = vmatpush.bf16.msra.mxu0 %v180
  %240 = vmatpush.bf16.msra.mxu0 %v178
  %241 = vmatpush.bf16.msra.mxu0 %v176
  %242 = vmatpush.bf16.msra.mxu0 %v174
  %243 = vmatpush.bf16.msra.mxu0 %v172
  %244 = vmatmul.bf16.gmra.mxu0 %v72
  %v245 = vpop.f32.mrf.mxu0
  %v246 = vadd.f32 %v62, %v245
  %v247 = vpop.f32.mrf.mxu0
  %v248 = vadd.f32 %v62, %v247
  %249 = vdwg.mxu0
  %250 = vmatpush.bf16.msra.mxu0 %v202
  %251 = vmatpush.bf16.msra.mxu0 %v200
  %252 = vmatpush.bf16.msra.mxu0 %v198
  %253 = vmatpush.bf16.msra.mxu0 %v196
  %254 = vmatpush.bf16.msra.mxu0 %v194
  %255 = vmatpush.bf16.msra.mxu0 %v192
  %256 = vmatpush.bf16.msra.mxu0 %v190
  %257 = vmatpush.bf16.msra.mxu0 %v188
  %258 = vmatmul.bf16.gmra.mxu0 %v73
  %v259 = vpop.f32.mrf.mxu0
  %v260 = vadd.f32 %v246, %v259
  %v261 = vpop.f32.mrf.mxu0
  %v262 = vadd.f32 %v248, %v261
  %263 = vdwg.mxu0
  %264 = vmatpush.bf16.msra.mxu0 %v187
  %265 = vmatpush.bf16.msra.mxu0 %v185
  %266 = vmatpush.bf16.msra.mxu0 %v183
  %267 = vmatpush.bf16.msra.mxu0 %v181
  %268 = vmatpush.bf16.msra.mxu0 %v179
  %269 = vmatpush.bf16.msra.mxu0 %v177
  %270 = vmatpush.bf16.msra.mxu0 %v175
  %271 = vmatpush.bf16.msra.mxu0 %v173
  %272 = vmatmul.bf16.gmra.mxu0 %v72
  %v273 = vpop.f32.mrf.mxu0
  %v274 = vadd.f32 %v63, %v273
  %v275 = vpop.f32.mrf.mxu0
  %v276 = vadd.f32 %v63, %v275
  %277 = vdwg.mxu0
  %278 = vmatpush.bf16.msra.mxu0 %v203
  %279 = vmatpush.bf16.msra.mxu0 %v201
  %280 = vmatpush.bf16.msra.mxu0 %v199
  %281 = vmatpush.bf16.msra.mxu0 %v197
  %282 = vmatpush.bf16.msra.mxu0 %v195
  %283 = vmatpush.bf16.msra.mxu0 %v193
  %284 = vmatpush.bf16.msra.mxu0 %v191
  %285 = vmatpush.bf16.msra.mxu0 %v189
  %286 = vmatmul.bf16.gmra.mxu0 %v73
  %v287 = vpop.f32.mrf.mxu0
  %v288 = vadd.f32 %v274, %v287
  %v289 = vpop.f32.mrf.mxu0
  %v290 = vadd.f32 %v276, %v289
  %291 = vdwg.mxu0
  %v292 = vmax.f32 %v260, 0.0
  %v293 = vmax.f32 %v288, 0.0
  %v294 = vmax.f32 %v262, 0.0
  %v295 = vmax.f32 %v290, 0.0
  %v296 = vpack.c.bf16 %v294, %v292
  %v297 = vpack.c.bf16 %v295, %v293
  %v298 = vld [vmem:[%s3] sm:$0xff]
  %v299 = vld [vmem:[%s3 + $0x8] sm:$0xff]
  %v300 = vld [vmem:[%s3 + $0x10] sm:$0xff]
  %v301 = vld [vmem:[%s3 + $0x18] sm:$0xff]
  %v302 = vld [vmem:[%s3 + $0x20] sm:$0xff]
  %v303 = vld [vmem:[%s3 + $0x28] sm:$0xff]
  %v304 = vld [vmem:[%s3 + $0x30] sm:$0xff]
  %v305 = vld [vmem:[%s3 + $0x38] sm:$0xff]
  %v306 = vld [vmem:[%s3 + $0x40] sm:$0xff]
  %v307 = vld [vmem:[%s3 + $0x48] sm:$0xff]
  %v308 = vld [vmem:[%s3 + $0x50] sm:$0xff]
  %v309 = vld [vmem:[%s3 + $0x58] sm:$0xff]
  %v310 = vld [vmem:[%s3 + $0x60] sm:$0xff]
  %v311 = vld [vmem:[%s3 + $0x68] sm:$0xff]
  %v312 = vld [vmem:[%s3 + $0x70] sm:$0xff]
  %v313 = vld [vmem:[%s3 + $0x78] sm:$0xff]
  %v314 = vld [vmem:[%s3 + $0x80] sm:$0xff]
  %v315 = vld [vmem:[%s3 + $0x88] sm:$0xff]
  %v316 = vld [vmem:[%s3 + $0x90] sm:$0xff]
  %v317 = vld [vmem:[%s3 + $0x98] sm:$0xff]
  %v318 = vld [vmem:[%s3 + $0xa0] sm:$0xff]
  %v319 = vld [vmem:[%s3 + $0xa8] sm:$0xff]
  %v320 = vld [vmem:[%s3 + $0xb0] sm:$0xff]
  %v321 = vld [vmem:[%s3 + $0xb8] sm:$0xff]
  %v322 = vld [vmem:[%s3 + $0xc0] sm:$0xff]
  %v323 = vld [vmem:[%s3 + $0xc8] sm:$0xff]
  %v324 = vld [vmem:[%s3 + $0xd0] sm:$0xff]
  %v325 = vld [vmem:[%s3 + $0xd8] sm:$0xff]
  %v326 = vld [vmem:[%s3 + $0xe0] sm:$0xff]
  %v327 = vld [vmem:[%s3 + $0xe8] sm:$0xff]
  %v328 = vld [vmem:[%s3 + $0xf0] sm:$0xff]
  %v329 = vld [vmem:[%s3 + $0xf8] sm:$0xff]
  %v330 = vld [vmem:[%s4] sm:$0x3]
  %v332 = vperm.slane %v330, 0
  %v333 = vperm.slane %v330, 1
  %v368 = vunpack.c.l.b16 %v298
  %v369 = vunpack.c.h.b16 %v298
  %v370 = vunpack.c.l.b16 %v299
  %v371 = vunpack.c.h.b16 %v299
  %v372 = vunpack.c.l.b16 %v300
  %v373 = vunpack.c.h.b16 %v300
  %v374 = vunpack.c.l.b16 %v301
  %v375 = vunpack.c.h.b16 %v301
  %v376 = vunpack.c.l.b16 %v302
  %v377 = vunpack.c.h.b16 %v302
  %v378 = vunpack.c.l.b16 %v303
  %v379 = vunpack.c.h.b16 %v303
  %v380 = vunpack.c.l.b16 %v304
  %v381 = vunpack.c.h.b16 %v304
  %v382 = vunpack.c.l.b16 %v305
  %v383 = vunpack.c.h.b16 %v305
  %v384 = vunpack.c.l.b16 %v306
  %v385 = vunpack.c.h.b16 %v306
  %v386 = vunpack.c.l.b16 %v307
  %v387 = vunpack.c.h.b16 %v307
  %v388 = vunpack.c.l.b16 %v308
  %v389 = vunpack.c.h.b16 %v308
  %v390 = vunpack.c.l.b16 %v309
  %v391 = vunpack.c.h.b16 %v309
  %v392 = vunpack.c.l.b16 %v310
  %v393 = vunpack.c.h.b16 %v310
  %v394 = vunpack.c.l.b16 %v311
  %v395 = vunpack.c.h.b16 %v311
  %v396 = vunpack.c.l.b16 %v312
  %v397 = vunpack.c.h.b16 %v312
  %v398 = vunpack.c.l.b16 %v313
  %v399 = vunpack.c.h.b16 %v313
  %v400 = vunpack.c.l.b16 %v314
  %v401 = vunpack.c.h.b16 %v314
  %v402 = vunpack.c.l.b16 %v315
  %v403 = vunpack.c.h.b16 %v315
  %v404 = vunpack.c.l.b16 %v316
  %v405 = vunpack.c.h.b16 %v316
  %v406 = vunpack.c.l.b16 %v317
  %v407 = vunpack.c.h.b16 %v317
  %v408 = vunpack.c.l.b16 %v318
  %v409 = vunpack.c.h.b16 %v318
  %v410 = vunpack.c.l.b16 %v319
  %v411 = vunpack.c.h.b16 %v319
  %v412 = vunpack.c.l.b16 %v320
  %v413 = vunpack.c.h.b16 %v320
  %v414 = vunpack.c.l.b16 %v321
  %v415 = vunpack.c.h.b16 %v321
  %v416 = vunpack.c.l.b16 %v322
  %v417 = vunpack.c.h.b16 %v322
  %v418 = vunpack.c.l.b16 %v323
  %v419 = vunpack.c.h.b16 %v323
  %v420 = vunpack.c.l.b16 %v324
  %v421 = vunpack.c.h.b16 %v324
  %v422 = vunpack.c.l.b16 %v325
  %v423 = vunpack.c.h.b16 %v325
  %v424 = vunpack.c.l.b16 %v326
  %v425 = vunpack.c.h.b16 %v326
  %v426 = vunpack.c.l.b16 %v327
  %v427 = vunpack.c.h.b16 %v327
  %v428 = vunpack.c.l.b16 %v328
  %v429 = vunpack.c.h.b16 %v328
  %v430 = vunpack.c.l.b16 %v329
  %v431 = vunpack.c.h.b16 %v329
  %v432 = vpack.c.b16 %v370, %v368
  %v433 = vpack.c.b16 %v371, %v369
  %v434 = vpack.c.b16 %v374, %v372
  %v435 = vpack.c.b16 %v375, %v373
  %v436 = vpack.c.b16 %v378, %v376
  %v437 = vpack.c.b16 %v379, %v377
  %v438 = vpack.c.b16 %v382, %v380
  %v439 = vpack.c.b16 %v383, %v381
  %v440 = vpack.c.b16 %v386, %v384
  %v441 = vpack.c.b16 %v387, %v385
  %v442 = vpack.c.b16 %v390, %v388
  %v443 = vpack.c.b16 %v391, %v389
  %v444 = vpack.c.b16 %v394, %v392
  %v445 = vpack.c.b16 %v395, %v393
  %v446 = vpack.c.b16 %v398, %v396
  %v447 = vpack.c.b16 %v399, %v397
  %v448 = vpack.c.b16 %v402, %v400
  %v449 = vpack.c.b16 %v403, %v401
  %v450 = vpack.c.b16 %v406, %v404
  %v451 = vpack.c.b16 %v407, %v405
  %v452 = vpack.c.b16 %v410, %v408
  %v453 = vpack.c.b16 %v411, %v409
  %v454 = vpack.c.b16 %v414, %v412
  %v455 = vpack.c.b16 %v415, %v413
  %v456 = vpack.c.b16 %v418, %v416
  %v457 = vpack.c.b16 %v419, %v417
  %v458 = vpack.c.b16 %v422, %v420
  %v459 = vpack.c.b16 %v423, %v421
  %v460 = vpack.c.b16 %v426, %v424
  %v461 = vpack.c.b16 %v427, %v425
  %v462 = vpack.c.b16 %v430, %v428
  %v463 = vpack.c.b16 %v431, %v429
  %496 = vmatpush.bf16.msra.mxu0 %v446
  %497 = vmatpush.bf16.msra.mxu0 %v444
  %498 = vmatpush.bf16.msra.mxu0 %v442
  %499 = vmatpush.bf16.msra.mxu0 %v440
  %500 = vmatpush.bf16.msra.mxu0 %v438
  %501 = vmatpush.bf16.msra.mxu0 %v436
  %502 = vmatpush.bf16.msra.mxu0 %v434
  %503 = vmatpush.bf16.msra.mxu0 %v432
  %504 = vmatmul.bf16.gmra.mxu0 %v296
  %v505 = vpop.f32.mrf.mxu0
  %v506 = vadd.f32 %v332, %v505
  %v507 = vpop.f32.mrf.mxu0
  %v508 = vadd.f32 %v332, %v507
  %509 = vdwg.mxu0
  %510 = vmatpush.bf16.msra.mxu0 %v462
  %511 = vmatpush.bf16.msra.mxu0 %v460
  %512 = vmatpush.bf16.msra.mxu0 %v458
  %513 = vmatpush.bf16.msra.mxu0 %v456
  %514 = vmatpush.bf16.msra.mxu0 %v454
  %515 = vmatpush.bf16.msra.mxu0 %v452
  %516 = vmatpush.bf16.msra.mxu0 %v450
  %517 = vmatpush.bf16.msra.mxu0 %v448
  %518 = vmatmul.bf16.gmra.mxu0 %v297
  %v519 = vpop.f32.mrf.mxu0
  %v520 = vadd.f32 %v506, %v519
  %v521 = vpop.f32.mrf.mxu0
  %v522 = vadd.f32 %v508, %v521
  %523 = vdwg.mxu0
  %524 = vmatpush.bf16.msra.mxu0 %v447
  %525 = vmatpush.bf16.msra.mxu0 %v445
  %526 = vmatpush.bf16.msra.mxu0 %v443
  %527 = vmatpush.bf16.msra.mxu0 %v441
  %528 = vmatpush.bf16.msra.mxu0 %v439
  %529 = vmatpush.bf16.msra.mxu0 %v437
  %530 = vmatpush.bf16.msra.mxu0 %v435
  %531 = vmatpush.bf16.msra.mxu0 %v433
  %532 = vmatmul.bf16.gmra.mxu0 %v296
  %v533 = vpop.f32.mrf.mxu0
  %v534 = vadd.f32 %v333, %v533
  %v535 = vpop.f32.mrf.mxu0
  %v536 = vadd.f32 %v333, %v535
  %537 = vdwg.mxu0
  %538 = vmatpush.bf16.msra.mxu0 %v463
  %539 = vmatpush.bf16.msra.mxu0 %v461
  %540 = vmatpush.bf16.msra.mxu0 %v459
  %541 = vmatpush.bf16.msra.mxu0 %v457
  %542 = vmatpush.bf16.msra.mxu0 %v455
  %543 = vmatpush.bf16.msra.mxu0 %v453
  %544 = vmatpush.bf16.msra.mxu0 %v451
  %545 = vmatpush.bf16.msra.mxu0 %v449
  %546 = vmatmul.bf16.gmra.mxu0 %v297
  %v547 = vpop.f32.mrf.mxu0
  %v548 = vadd.f32 %v534, %v547
  %v549 = vpop.f32.mrf.mxu0
  %v550 = vadd.f32 %v536, %v549
  %551 = vdwg.mxu0
  %v552 = vmax.f32 %v520, 0.0
  %v553 = vmax.f32 %v548, 0.0
  %v554 = vmax.f32 %v522, 0.0
  %v555 = vmax.f32 %v550, 0.0
  %v556 = vpack.c.bf16 %v554, %v552
  %v557 = vpack.c.bf16 %v555, %v553
  %v558 = vld [vmem:[%s5] sm:$0xff]
  %v559 = vld [vmem:[%s5 + $0x8] sm:$0xff]
  %v560 = vld [vmem:[%s5 + $0x10] sm:$0xff]
  %v561 = vld [vmem:[%s5 + $0x18] sm:$0xf]
  %v562 = vld [vmem:[%s5 + $0x1c] sm:$0xff]
  %v563 = vld [vmem:[%s5 + $0x24] sm:$0xff]
  %v564 = vld [vmem:[%s5 + $0x2c] sm:$0xff]
  %v565 = vld [vmem:[%s5 + $0x34] sm:$0xf]
  %v566 = vld [vmem:[%s5 + $0x38] sm:$0xff]
  %v567 = vld [vmem:[%s5 + $0x40] sm:$0xff]
  %v568 = vld [vmem:[%s5 + $0x48] sm:$0xff]
  %v569 = vld [vmem:[%s5 + $0x50] sm:$0xf]
  %v570 = vld [vmem:[%s5 + $0x54] sm:$0xff]
  %v571 = vld [vmem:[%s5 + $0x5c] sm:$0xff]
  %v572 = vld [vmem:[%s5 + $0x64] sm:$0xff]
  %v573 = vld [vmem:[%s5 + $0x6c] sm:$0xf]
  %v574 = vld [vmem:[%s5 + $0x70] sm:$0xff]
  %v575 = vld [vmem:[%s5 + $0x78] sm:$0xff]
  %v576 = vld [vmem:[%s5 + $0x80] sm:$0xff]
  %v577 = vld [vmem:[%s5 + $0x88] sm:$0xf]
  %v578 = vld [vmem:[%s5 + $0x8c] sm:$0xff]
  %v579 = vld [vmem:[%s5 + $0x94] sm:$0xff]
  %v580 = vld [vmem:[%s5 + $0x9c] sm:$0xff]
  %v581 = vld [vmem:[%s5 + $0xa4] sm:$0xf]
  %v582 = vld [vmem:[%s5 + $0xa8] sm:$0xff]
  %v583 = vld [vmem:[%s5 + $0xb0] sm:$0xff]
  %v584 = vld [vmem:[%s5 + $0xb8] sm:$0xff]
  %v585 = vld [vmem:[%s5 + $0xc0] sm:$0xf]
  %v586 = vld [vmem:[%s5 + $0xc4] sm:$0xff]
  %v587 = vld [vmem:[%s5 + $0xcc] sm:$0xff]
  %v588 = vld [vmem:[%s5 + $0xd4] sm:$0xff]
  %v589 = vld [vmem:[%s5 + $0xdc] sm:$0xf]
  %v590 = vld [vmem:[%s5 + $0xe0] sm:$0xff]
  %v591 = vld [vmem:[%s5 + $0xe8] sm:$0xff]
  %v592 = vld [vmem:[%s5 + $0xf0] sm:$0xff]
  %v593 = vld [vmem:[%s5 + $0xf8] sm:$0xf]
  %v594 = vld [vmem:[%s5 + $0xfc] sm:$0xff]
  %v595 = vld [vmem:[%s5 + $0x104] sm:$0xff]
  %v596 = vld [vmem:[%s5 + $0x10c] sm:$0xff]
  %v597 = vld [vmem:[%s5 + $0x114] sm:$0xf]
  %v598 = vld [vmem:[%s5 + $0x118] sm:$0xff]
  %v599 = vld [vmem:[%s5 + $0x120] sm:$0xff]
  %v600 = vld [vmem:[%s5 + $0x128] sm:$0xff]
  %v601 = vld [vmem:[%s5 + $0x130] sm:$0xf]
  %v602 = vld [vmem:[%s5 + $0x134] sm:$0xff]
  %v603 = vld [vmem:[%s5 + $0x13c] sm:$0xff]
  %v604 = vld [vmem:[%s5 + $0x144] sm:$0xff]
  %v605 = vld [vmem:[%s5 + $0x14c] sm:$0xf]
  %v606 = vld [vmem:[%s5 + $0x150] sm:$0xff]
  %v607 = vld [vmem:[%s5 + $0x158] sm:$0xff]
  %v608 = vld [vmem:[%s5 + $0x160] sm:$0xff]
  %v609 = vld [vmem:[%s5 + $0x168] sm:$0xf]
  %v610 = vld [vmem:[%s5 + $0x16c] sm:$0xff]
  %v611 = vld [vmem:[%s5 + $0x174] sm:$0xff]
  %v612 = vld [vmem:[%s5 + $0x17c] sm:$0xff]
  %v613 = vld [vmem:[%s5 + $0x184] sm:$0xf]
  %v614 = vld [vmem:[%s5 + $0x188] sm:$0xff]
  %v615 = vld [vmem:[%s5 + $0x190] sm:$0xff]
  %v616 = vld [vmem:[%s5 + $0x198] sm:$0xff]
  %v617 = vld [vmem:[%s5 + $0x1a0] sm:$0xf]
  %v618 = vld [vmem:[%s5 + $0x1a4] sm:$0xff]
  %v619 = vld [vmem:[%s5 + $0x1ac] sm:$0xff]
  %v620 = vld [vmem:[%s5 + $0x1b4] sm:$0xff]
  %v621 = vld [vmem:[%s5 + $0x1bc] sm:$0xf]
  %v622 = vld [vmem:[%s5 + $0x1c0] sm:$0xff]
  %v623 = vld [vmem:[%s5 + $0x1c8] sm:$0xff]
  %v624 = vld [vmem:[%s5 + $0x1d0] sm:$0xff]
  %v625 = vld [vmem:[%s5 + $0x1d8] sm:$0xf]
  %v626 = vld [vmem:[%s5 + $0x1dc] sm:$0xff]
  %v627 = vld [vmem:[%s5 + $0x1e4] sm:$0xff]
  %v628 = vld [vmem:[%s5 + $0x1ec] sm:$0xff]
  %v629 = vld [vmem:[%s5 + $0x1f4] sm:$0xf]
  %v630 = vld [vmem:[%s5 + $0x1f8] sm:$0xff]
  %v631 = vld [vmem:[%s5 + $0x200] sm:$0xff]
  %v632 = vld [vmem:[%s5 + $0x208] sm:$0xff]
  %v633 = vld [vmem:[%s5 + $0x210] sm:$0xf]
  %v634 = vld [vmem:[%s5 + $0x214] sm:$0xff]
  %v635 = vld [vmem:[%s5 + $0x21c] sm:$0xff]
  %v636 = vld [vmem:[%s5 + $0x224] sm:$0xff]
  %v637 = vld [vmem:[%s5 + $0x22c] sm:$0xf]
  %v638 = vld [vmem:[%s5 + $0x230] sm:$0xff]
  %v639 = vld [vmem:[%s5 + $0x238] sm:$0xff]
  %v640 = vld [vmem:[%s5 + $0x240] sm:$0xff]
  %v641 = vld [vmem:[%s5 + $0x248] sm:$0xf]
  %v642 = vld [vmem:[%s5 + $0x24c] sm:$0xff]
  %v643 = vld [vmem:[%s5 + $0x254] sm:$0xff]
  %v644 = vld [vmem:[%s5 + $0x25c] sm:$0xff]
  %v645 = vld [vmem:[%s5 + $0x264] sm:$0xf]
  %v646 = vld [vmem:[%s5 + $0x268] sm:$0xff]
  %v647 = vld [vmem:[%s5 + $0x270] sm:$0xff]
  %v648 = vld [vmem:[%s5 + $0x278] sm:$0xff]
  %v649 = vld [vmem:[%s5 + $0x280] sm:$0xf]
  %v650 = vld [vmem:[%s5 + $0x284] sm:$0xff]
  %v651 = vld [vmem:[%s5 + $0x28c] sm:$0xff]
  %v652 = vld [vmem:[%s5 + $0x294] sm:$0xff]
  %v653 = vld [vmem:[%s5 + $0x29c] sm:$0xf]
  %v654 = vld [vmem:[%s5 + $0x2a0] sm:$0xff]
  %v655 = vld [vmem:[%s5 + $0x2a8] sm:$0xff]
  %v656 = vld [vmem:[%s5 + $0x2b0] sm:$0xff]
  %v657 = vld [vmem:[%s5 + $0x2b8] sm:$0xf]
  %v658 = vld [vmem:[%s5 + $0x2bc] sm:$0xff]
  %v659 = vld [vmem:[%s5 + $0x2c4] sm:$0xff]
  %v660 = vld [vmem:[%s5 + $0x2cc] sm:$0xff]
  %v661 = vld [vmem:[%s5 + $0x2d4] sm:$0xf]
  %v662 = vld [vmem:[%s5 + $0x2d8] sm:$0xff]
  %v663 = vld [vmem:[%s5 + $0x2e0] sm:$0xff]
  %v664 = vld [vmem:[%s5 + $0x2e8] sm:$0xff]
  %v665 = vld [vmem:[%s5 + $0x2f0] sm:$0xf]
  %v666 = vld [vmem:[%s5 + $0x2f4] sm:$0xff]
  %v667 = vld [vmem:[%s5 + $0x2fc] sm:$0xff]
  %v668 = vld [vmem:[%s5 + $0x304] sm:$0xff]
  %v669 = vld [vmem:[%s5 + $0x30c] sm:$0xf]
  %v670 = vld [vmem:[%s5 + $0x310] sm:$0xff]
  %v671 = vld [vmem:[%s5 + $0x318] sm:$0xff]
  %v672 = vld [vmem:[%s5 + $0x320] sm:$0xff]
  %v673 = vld [vmem:[%s5 + $0x328] sm:$0xf]
  %v674 = vld [vmem:[%s5 + $0x32c] sm:$0xff]
  %v675 = vld [vmem:[%s5 + $0x334] sm:$0xff]
  %v676 = vld [vmem:[%s5 + $0x33c] sm:$0xff]
  %v677 = vld [vmem:[%s5 + $0x344] sm:$0xf]
  %v678 = vld [vmem:[%s5 + $0x348] sm:$0xff]
  %v679 = vld [vmem:[%s5 + $0x350] sm:$0xff]
  %v680 = vld [vmem:[%s5 + $0x358] sm:$0xff]
  %v681 = vld [vmem:[%s5 + $0x360] sm:$0xf]
  %v682 = vld [vmem:[%s5 + $0x364] sm:$0xff]
  %v683 = vld [vmem:[%s5 + $0x36c] sm:$0xff]
  %v684 = vld [vmem:[%s5 + $0x374] sm:$0xff]
  %v685 = vld [vmem:[%s5 + $0x37c] sm:$0xf]
  %v686 = vld [vmem:[%s6] sm:$0x7f]
  %v688 = vperm.slane %v686, 0
  %v689 = vperm.slane %v686, 1
  %v690 = vperm.slane %v686, 2
  %v691 = vperm.slane %v686, 3
  %v692 = vperm.slane %v686, 4
  %v693 = vperm.slane %v686, 5
  %v694 = vperm.slane %v686, 6
  %v830 = vunpack.c.l.b16 %v558
  %v831 = vunpack.c.h.b16 %v558
  %v832 = vunpack.c.l.b16 %v559
  %v833 = vunpack.c.h.b16 %v559
  %v834 = vunpack.c.l.b16 %v560
  %v835 = vunpack.c.h.b16 %v560
  %v836 = vunpack.c.l.b16 %v561
  %v837 = vunpack.c.l.b16 %v562
  %v838 = vunpack.c.h.b16 %v562
  %v839 = vunpack.c.l.b16 %v563
  %v840 = vunpack.c.h.b16 %v563
  %v841 = vunpack.c.l.b16 %v564
  %v842 = vunpack.c.h.b16 %v564
  %v843 = vunpack.c.l.b16 %v565
  %v844 = vunpack.c.l.b16 %v566
  %v845 = vunpack.c.h.b16 %v566
  %v846 = vunpack.c.l.b16 %v567
  %v847 = vunpack.c.h.b16 %v567
  %v848 = vunpack.c.l.b16 %v568
  %v849 = vunpack.c.h.b16 %v568
  %v850 = vunpack.c.l.b16 %v569
  %v851 = vunpack.c.l.b16 %v570
  %v852 = vunpack.c.h.b16 %v570
  %v853 = vunpack.c.l.b16 %v571
  %v854 = vunpack.c.h.b16 %v571
  %v855 = vunpack.c.l.b16 %v572
  %v856 = vunpack.c.h.b16 %v572
  %v857 = vunpack.c.l.b16 %v573
  %v858 = vunpack.c.l.b16 %v574
  %v859 = vunpack.c.h.b16 %v574
  %v860 = vunpack.c.l.b16 %v575
  %v861 = vunpack.c.h.b16 %v575
  %v862 = vunpack.c.l.b16 %v576
  %v863 = vunpack.c.h.b16 %v576
  %v864 = vunpack.c.l.b16 %v577
  %v865 = vunpack.c.l.b16 %v578
  %v866 = vunpack.c.h.b16 %v578
  %v867 = vunpack.c.l.b16 %v579
  %v868 = vunpack.c.h.b16 %v579
  %v869 = vunpack.c.l.b16 %v580
  %v870 = vunpack.c.h.b16 %v580
  %v871 = vunpack.c.l.b16 %v581
  %v872 = vunpack.c.l.b16 %v582
  %v873 = vunpack.c.h.b16 %v582
  %v874 = vunpack.c.l.b16 %v583
  %v875 = vunpack.c.h.b16 %v583
  %v876 = vunpack.c.l.b16 %v584
  %v877 = vunpack.c.h.b16 %v584
  %v878 = vunpack.c.l.b16 %v585
  %v879 = vunpack.c.l.b16 %v586
  %v880 = vunpack.c.h.b16 %v586
  %v881 = vunpack.c.l.b16 %v587
  %v882 = vunpack.c.h.b16 %v587
  %v883 = vunpack.c.l.b16 %v588
  %v884 = vunpack.c.h.b16 %v588
  %v885 = vunpack.c.l.b16 %v589
  %v886 = vunpack.c.l.b16 %v590
  %v887 = vunpack.c.h.b16 %v590
  %v888 = vunpack.c.l.b16 %v591
  %v889 = vunpack.c.h.b16 %v591
  %v890 = vunpack.c.l.b16 %v592
  %v891 = vunpack.c.h.b16 %v592
  %v892 = vunpack.c.l.b16 %v593
  %v893 = vunpack.c.l.b16 %v594
  %v894 = vunpack.c.h.b16 %v594
  %v895 = vunpack.c.l.b16 %v595
  %v896 = vunpack.c.h.b16 %v595
  %v897 = vunpack.c.l.b16 %v596
  %v898 = vunpack.c.h.b16 %v596
  %v899 = vunpack.c.l.b16 %v597
  %v900 = vunpack.c.l.b16 %v598
  %v901 = vunpack.c.h.b16 %v598
  %v902 = vunpack.c.l.b16 %v599
  %v903 = vunpack.c.h.b16 %v599
  %v904 = vunpack.c.l.b16 %v600
  %v905 = vunpack.c.h.b16 %v600
  %v906 = vunpack.c.l.b16 %v601
  %v907 = vunpack.c.l.b16 %v602
  %v908 = vunpack.c.h.b16 %v602
  %v909 = vunpack.c.l.b16 %v603
  %v910 = vunpack.c.h.b16 %v603
  %v911 = vunpack.c.l.b16 %v604
  %v912 = vunpack.c.h.b16 %v604
  %v913 = vunpack.c.l.b16 %v605
  %v914 = vunpack.c.l.b16 %v606
  %v915 = vunpack.c.h.b16 %v606
  %v916 = vunpack.c.l.b16 %v607
  %v917 = vunpack.c.h.b16 %v607
  %v918 = vunpack.c.l.b16 %v608
  %v919 = vunpack.c.h.b16 %v608
  %v920 = vunpack.c.l.b16 %v609
  %v921 = vunpack.c.l.b16 %v610
  %v922 = vunpack.c.h.b16 %v610
  %v923 = vunpack.c.l.b16 %v611
  %v924 = vunpack.c.h.b16 %v611
  %v925 = vunpack.c.l.b16 %v612
  %v926 = vunpack.c.h.b16 %v612
  %v927 = vunpack.c.l.b16 %v613
  %v928 = vunpack.c.l.b16 %v614
  %v929 = vunpack.c.h.b16 %v614
  %v930 = vunpack.c.l.b16 %v615
  %v931 = vunpack.c.h.b16 %v615
  %v932 = vunpack.c.l.b16 %v616
  %v933 = vunpack.c.h.b16 %v616
  %v934 = vunpack.c.l.b16 %v617
  %v935 = vunpack.c.l.b16 %v618
  %v936 = vunpack.c.h.b16 %v618
  %v937 = vunpack.c.l.b16 %v619
  %v938 = vunpack.c.h.b16 %v619
  %v939 = vunpack.c.l.b16 %v620
  %v940 = vunpack.c.h.b16 %v620
  %v941 = vunpack.c.l.b16 %v621
  %v942 = vunpack.c.l.b16 %v622
  %v943 = vunpack.c.h.b16 %v622
  %v944 = vunpack.c.l.b16 %v623
  %v945 = vunpack.c.h.b16 %v623
  %v946 = vunpack.c.l.b16 %v624
  %v947 = vunpack.c.h.b16 %v624
  %v948 = vunpack.c.l.b16 %v625
  %v949 = vunpack.c.l.b16 %v626
  %v950 = vunpack.c.h.b16 %v626
  %v951 = vunpack.c.l.b16 %v627
  %v952 = vunpack.c.h.b16 %v627
  %v953 = vunpack.c.l.b16 %v628
  %v954 = vunpack.c.h.b16 %v628
  %v955 = vunpack.c.l.b16 %v629
  %v956 = vunpack.c.l.b16 %v630
  %v957 = vunpack.c.h.b16 %v630
  %v958 = vunpack.c.l.b16 %v631
  %v959 = vunpack.c.h.b16 %v631
  %v960 = vunpack.c.l.b16 %v632
  %v961 = vunpack.c.h.b16 %v632
  %v962 = vunpack.c.l.b16 %v633
  %v963 = vunpack.c.l.b16 %v634
  %v964 = vunpack.c.h.b16 %v634
  %v965 = vunpack.c.l.b16 %v635
  %v966 = vunpack.c.h.b16 %v635
  %v967 = vunpack.c.l.b16 %v636
  %v968 = vunpack.c.h.b16 %v636
  %v969 = vunpack.c.l.b16 %v637
  %v970 = vunpack.c.l.b16 %v638
  %v971 = vunpack.c.h.b16 %v638
  %v972 = vunpack.c.l.b16 %v639
  %v973 = vunpack.c.h.b16 %v639
  %v974 = vunpack.c.l.b16 %v640
  %v975 = vunpack.c.h.b16 %v640
  %v976 = vunpack.c.l.b16 %v641
  %v977 = vunpack.c.l.b16 %v642
  %v978 = vunpack.c.h.b16 %v642
  %v979 = vunpack.c.l.b16 %v643
  %v980 = vunpack.c.h.b16 %v643
  %v981 = vunpack.c.l.b16 %v644
  %v982 = vunpack.c.h.b16 %v644
  %v983 = vunpack.c.l.b16 %v645
  %v984 = vunpack.c.l.b16 %v646
  %v985 = vunpack.c.h.b16 %v646
  %v986 = vunpack.c.l.b16 %v647
  %v987 = vunpack.c.h.b16 %v647
  %v988 = vunpack.c.l.b16 %v648
  %v989 = vunpack.c.h.b16 %v648
  %v990 = vunpack.c.l.b16 %v649
  %v991 = vunpack.c.l.b16 %v650
  %v992 = vunpack.c.h.b16 %v650
  %v993 = vunpack.c.l.b16 %v651
  %v994 = vunpack.c.h.b16 %v651
  %v995 = vunpack.c.l.b16 %v652
  %v996 = vunpack.c.h.b16 %v652
  %v997 = vunpack.c.l.b16 %v653
  %v998 = vunpack.c.l.b16 %v654
  %v999 = vunpack.c.h.b16 %v654
  %v1000 = vunpack.c.l.b16 %v655
  %v1001 = vunpack.c.h.b16 %v655
  %v1002 = vunpack.c.l.b16 %v656
  %v1003 = vunpack.c.h.b16 %v656
  %v1004 = vunpack.c.l.b16 %v657
  %v1005 = vunpack.c.l.b16 %v658
  %v1006 = vunpack.c.h.b16 %v658
  %v1007 = vunpack.c.l.b16 %v659
  %v1008 = vunpack.c.h.b16 %v659
  %v1009 = vunpack.c.l.b16 %v660
  %v1010 = vunpack.c.h.b16 %v660
  %v1011 = vunpack.c.l.b16 %v661
  %v1012 = vunpack.c.l.b16 %v662
  %v1013 = vunpack.c.h.b16 %v662
  %v1014 = vunpack.c.l.b16 %v663
  %v1015 = vunpack.c.h.b16 %v663
  %v1016 = vunpack.c.l.b16 %v664
  %v1017 = vunpack.c.h.b16 %v664
  %v1018 = vunpack.c.l.b16 %v665
  %v1019 = vunpack.c.l.b16 %v666
  %v1020 = vunpack.c.h.b16 %v666
  %v1021 = vunpack.c.l.b16 %v667
  %v1022 = vunpack.c.h.b16 %v667
  %v1023 = vunpack.c.l.b16 %v668
  %v1024 = vunpack.c.h.b16 %v668
  %v1025 = vunpack.c.l.b16 %v669
  %v1026 = vunpack.c.l.b16 %v670
  %v1027 = vunpack.c.h.b16 %v670
  %v1028 = vunpack.c.l.b16 %v671
  %v1029 = vunpack.c.h.b16 %v671
  %v1030 = vunpack.c.l.b16 %v672
  %v1031 = vunpack.c.h.b16 %v672
  %v1032 = vunpack.c.l.b16 %v673
  %v1033 = vunpack.c.l.b16 %v674
  %v1034 = vunpack.c.h.b16 %v674
  %v1035 = vunpack.c.l.b16 %v675
  %v1036 = vunpack.c.h.b16 %v675
  %v1037 = vunpack.c.l.b16 %v676
  %v1038 = vunpack.c.h.b16 %v676
  %v1039 = vunpack.c.l.b16 %v677
  %v1040 = vunpack.c.l.b16 %v678
  %v1041 = vunpack.c.h.b16 %v678
  %v1042 = vunpack.c.l.b16 %v679
  %v1043 = vunpack.c.h.b16 %v679
  %v1044 = vunpack.c.l.b16 %v680
  %v1045 = vunpack.c.h.b16 %v680
  %v1046 = vunpack.c.l.b16 %v681
  %v1047 = vunpack.c.l.b16 %v682
  %v1048 = vunpack.c.h.b16 %v682
  %v1049 = vunpack.c.l.b16 %v683
  %v1050 = vunpack.c.h.b16 %v683
  %v1051 = vunpack.c.l.b16 %v684
  %v1052 = vunpack.c.h.b16 %v684
  %v1053 = vunpack.c.l.b16 %v685
  %v1054 = vpack.c.b16 %v837, %v830
  %v1055 = vpack.c.b16 %v838, %v831
  %v1056 = vpack.c.b16 %v839, %v832
  %v1057 = vpack.c.b16 %v840, %v833
  %v1058 = vpack.c.b16 %v841, %v834
  %v1059 = vpack.c.b16 %v842, %v835
  %v1060 = vpack.c.b16 %v843, %v836
  %v1061 = vpack.c.b16 %v851, %v844
  %v1062 = vpack.c.b16 %v852, %v845
  %v1063 = vpack.c.b16 %v853, %v846
  %v1064 = vpack.c.b16 %v854, %v847
  %v1065 = vpack.c.b16 %v855, %v848
  %v1066 = vpack.c.b16 %v856, %v849
  %v1067 = vpack.c.b16 %v857, %v850
  %v1068 = vpack.c.b16 %v865, %v858
  %v1069 = vpack.c.b16 %v866, %v859
  %v1070 = vpack.c.b16 %v867, %v860
  %v1071 = vpack.c.b16 %v868, %v861
  %v1072 = vpack.c.b16 %v869, %v862
  %v1073 = vpack.c.b16 %v870, %v863
  %v1074 = vpack.c.b16 %v871, %v864
  %v1075 = vpack.c.b16 %v879, %v872
  %v1076 = vpack.c.b16 %v880, %v873
  %v1077 = vpack.c.b16 %v881, %v874
  %v1078 = vpack.c.b16 %v882, %v875
  %v1079 = vpack.c.b16 %v883, %v876
  %v1080 = vpack.c.b16 %v884, %v877
  %v1081 = vpack.c.b16 %v885, %v878
  %v1082 = vpack.c.b16 %v893, %v886
  %v1083 = vpack.c.b16 %v894, %v887
  %v1084 = vpack.c.b16 %v895, %v888
  %v1085 = vpack.c.b16 %v896, %v889
  %v1086 = vpack.c.b16 %v897, %v890
  %v1087 = vpack.c.b16 %v898, %v891
  %v1088 = vpack.c.b16 %v899, %v892
  %v1089 = vpack.c.b16 %v907, %v900
  %v1090 = vpack.c.b16 %v908, %v901
  %v1091 = vpack.c.b16 %v909, %v902
  %v1092 = vpack.c.b16 %v910, %v903
  %v1093 = vpack.c.b16 %v911, %v904
  %v1094 = vpack.c.b16 %v912, %v905
  %v1095 = vpack.c.b16 %v913, %v906
  %v1096 = vpack.c.b16 %v921, %v914
  %v1097 = vpack.c.b16 %v922, %v915
  %v1098 = vpack.c.b16 %v923, %v916
  %v1099 = vpack.c.b16 %v924, %v917
  %v1100 = vpack.c.b16 %v925, %v918
  %v1101 = vpack.c.b16 %v926, %v919
  %v1102 = vpack.c.b16 %v927, %v920
  %v1103 = vpack.c.b16 %v935, %v928
  %v1104 = vpack.c.b16 %v936, %v929
  %v1105 = vpack.c.b16 %v937, %v930
  %v1106 = vpack.c.b16 %v938, %v931
  %v1107 = vpack.c.b16 %v939, %v932
  %v1108 = vpack.c.b16 %v940, %v933
  %v1109 = vpack.c.b16 %v941, %v934
  %v1110 = vpack.c.b16 %v949, %v942
  %v1111 = vpack.c.b16 %v950, %v943
  %v1112 = vpack.c.b16 %v951, %v944
  %v1113 = vpack.c.b16 %v952, %v945
  %v1114 = vpack.c.b16 %v953, %v946
  %v1115 = vpack.c.b16 %v954, %v947
  %v1116 = vpack.c.b16 %v955, %v948
  %v1117 = vpack.c.b16 %v963, %v956
  %v1118 = vpack.c.b16 %v964, %v957
  %v1119 = vpack.c.b16 %v965, %v958
  %v1120 = vpack.c.b16 %v966, %v959
  %v1121 = vpack.c.b16 %v967, %v960
  %v1122 = vpack.c.b16 %v968, %v961
  %v1123 = vpack.c.b16 %v969, %v962
  %v1124 = vpack.c.b16 %v977, %v970
  %v1125 = vpack.c.b16 %v978, %v971
  %v1126 = vpack.c.b16 %v979, %v972
  %v1127 = vpack.c.b16 %v980, %v973
  %v1128 = vpack.c.b16 %v981, %v974
  %v1129 = vpack.c.b16 %v982, %v975
  %v1130 = vpack.c.b16 %v983, %v976
  %v1131 = vpack.c.b16 %v991, %v984
  %v1132 = vpack.c.b16 %v992, %v985
  %v1133 = vpack.c.b16 %v993, %v986
  %v1134 = vpack.c.b16 %v994, %v987
  %v1135 = vpack.c.b16 %v995, %v988
  %v1136 = vpack.c.b16 %v996, %v989
  %v1137 = vpack.c.b16 %v997, %v990
  %v1138 = vpack.c.b16 %v1005, %v998
  %v1139 = vpack.c.b16 %v1006, %v999
  %v1140 = vpack.c.b16 %v1007, %v1000
  %v1141 = vpack.c.b16 %v1008, %v1001
  %v1142 = vpack.c.b16 %v1009, %v1002
  %v1143 = vpack.c.b16 %v1010, %v1003
  %v1144 = vpack.c.b16 %v1011, %v1004
  %v1145 = vpack.c.b16 %v1019, %v1012
  %v1146 = vpack.c.b16 %v1020, %v1013
  %v1147 = vpack.c.b16 %v1021, %v1014
  %v1148 = vpack.c.b16 %v1022, %v1015
  %v1149 = vpack.c.b16 %v1023, %v1016
  %v1150 = vpack.c.b16 %v1024, %v1017
  %v1151 = vpack.c.b16 %v1025, %v1018
  %v1152 = vpack.c.b16 %v1033, %v1026
  %v1153 = vpack.c.b16 %v1034, %v1027
  %v1154 = vpack.c.b16 %v1035, %v1028
  %v1155 = vpack.c.b16 %v1036, %v1029
  %v1156 = vpack.c.b16 %v1037, %v1030
  %v1157 = vpack.c.b16 %v1038, %v1031
  %v1158 = vpack.c.b16 %v1039, %v1032
  %v1159 = vpack.c.b16 %v1047, %v1040
  %v1160 = vpack.c.b16 %v1048, %v1041
  %v1161 = vpack.c.b16 %v1049, %v1042
  %v1162 = vpack.c.b16 %v1050, %v1043
  %v1163 = vpack.c.b16 %v1051, %v1044
  %v1164 = vpack.c.b16 %v1052, %v1045
  %v1165 = vpack.c.b16 %v1053, %v1046
  %1278 = vmatpush.bf16.msra.mxu0 %v1103
  %1279 = vmatpush.bf16.msra.mxu0 %v1096
  %1280 = vmatpush.bf16.msra.mxu0 %v1089
  %1281 = vmatpush.bf16.msra.mxu0 %v1082
  %1282 = vmatpush.bf16.msra.mxu0 %v1075
  %1283 = vmatpush.bf16.msra.mxu0 %v1068
  %1284 = vmatpush.bf16.msra.mxu0 %v1061
  %1285 = vmatpush.bf16.msra.mxu0 %v1054
  %1286 = vmatmul.bf16.gmra.mxu0 %v556
  %v1287 = vpop.f32.mrf.mxu0
  %v1288 = vadd.f32 %v688, %v1287
  %v1289 = vpop.f32.mrf.mxu0
  %v1290 = vadd.f32 %v688, %v1289
  %1291 = vdwg.mxu0
  %1292 = vmatpush.bf16.msra.mxu0 %v1159
  %1293 = vmatpush.bf16.msra.mxu0 %v1152
  %1294 = vmatpush.bf16.msra.mxu0 %v1145
  %1295 = vmatpush.bf16.msra.mxu0 %v1138
  %1296 = vmatpush.bf16.msra.mxu0 %v1131
  %1297 = vmatpush.bf16.msra.mxu0 %v1124
  %1298 = vmatpush.bf16.msra.mxu0 %v1117
  %1299 = vmatpush.bf16.msra.mxu0 %v1110
  %1300 = vmatmul.bf16.gmra.mxu0 %v557
  %v1301 = vpop.f32.mrf.mxu0
  %v1302 = vadd.f32 %v1288, %v1301
  %v1303 = vpop.f32.mrf.mxu0
  %v1304 = vadd.f32 %v1290, %v1303
  %1305 = vdwg.mxu0
  %1306 = vmatpush.bf16.msra.mxu0 %v1104
  %1307 = vmatpush.bf16.msra.mxu0 %v1097
  %1308 = vmatpush.bf16.msra.mxu0 %v1090
  %1309 = vmatpush.bf16.msra.mxu0 %v1083
  %1310 = vmatpush.bf16.msra.mxu0 %v1076
  %1311 = vmatpush.bf16.msra.mxu0 %v1069
  %1312 = vmatpush.bf16.msra.mxu0 %v1062
  %1313 = vmatpush.bf16.msra.mxu0 %v1055
  %1314 = vmatmul.bf16.gmra.mxu0 %v556
  %v1315 = vpop.f32.mrf.mxu0
  %v1316 = vadd.f32 %v689, %v1315
  %v1317 = vpop.f32.mrf.mxu0
  %v1318 = vadd.f32 %v689, %v1317
  %1319 = vdwg.mxu0
  %1320 = vmatpush.bf16.msra.mxu0 %v1160
  %1321 = vmatpush.bf16.msra.mxu0 %v1153
  %1322 = vmatpush.bf16.msra.mxu0 %v1146
  %1323 = vmatpush.bf16.msra.mxu0 %v1139
  %1324 = vmatpush.bf16.msra.mxu0 %v1132
  %1325 = vmatpush.bf16.msra.mxu0 %v1125
  %1326 = vmatpush.bf16.msra.mxu0 %v1118
  %1327 = vmatpush.bf16.msra.mxu0 %v1111
  %1328 = vmatmul.bf16.gmra.mxu0 %v557
  %v1329 = vpop.f32.mrf.mxu0
  %v1330 = vadd.f32 %v1316, %v1329
  %v1331 = vpop.f32.mrf.mxu0
  %v1332 = vadd.f32 %v1318, %v1331
  %1333 = vdwg.mxu0
  %1334 = vmatpush.bf16.msra.mxu0 %v1105
  %1335 = vmatpush.bf16.msra.mxu0 %v1098
  %1336 = vmatpush.bf16.msra.mxu0 %v1091
  %1337 = vmatpush.bf16.msra.mxu0 %v1084
  %1338 = vmatpush.bf16.msra.mxu0 %v1077
  %1339 = vmatpush.bf16.msra.mxu0 %v1070
  %1340 = vmatpush.bf16.msra.mxu0 %v1063
  %1341 = vmatpush.bf16.msra.mxu0 %v1056
  %1342 = vmatmul.bf16.gmra.mxu0 %v556
  %v1343 = vpop.f32.mrf.mxu0
  %v1344 = vadd.f32 %v690, %v1343
  %v1345 = vpop.f32.mrf.mxu0
  %v1346 = vadd.f32 %v690, %v1345
  %1347 = vdwg.mxu0
  %1348 = vmatpush.bf16.msra.mxu0 %v1161
  %1349 = vmatpush.bf16.msra.mxu0 %v1154
  %1350 = vmatpush.bf16.msra.mxu0 %v1147
  %1351 = vmatpush.bf16.msra.mxu0 %v1140
  %1352 = vmatpush.bf16.msra.mxu0 %v1133
  %1353 = vmatpush.bf16.msra.mxu0 %v1126
  %1354 = vmatpush.bf16.msra.mxu0 %v1119
  %1355 = vmatpush.bf16.msra.mxu0 %v1112
  %1356 = vmatmul.bf16.gmra.mxu0 %v557
  %v1357 = vpop.f32.mrf.mxu0
  %v1358 = vadd.f32 %v1344, %v1357
  %v1359 = vpop.f32.mrf.mxu0
  %v1360 = vadd.f32 %v1346, %v1359
  %1361 = vdwg.mxu0
  %1362 = vmatpush.bf16.msra.mxu0 %v1106
  %1363 = vmatpush.bf16.msra.mxu0 %v1099
  %1364 = vmatpush.bf16.msra.mxu0 %v1092
  %1365 = vmatpush.bf16.msra.mxu0 %v1085
  %1366 = vmatpush.bf16.msra.mxu0 %v1078
  %1367 = vmatpush.bf16.msra.mxu0 %v1071
  %1368 = vmatpush.bf16.msra.mxu0 %v1064
  %1369 = vmatpush.bf16.msra.mxu0 %v1057
  %1370 = vmatmul.bf16.gmra.mxu0 %v556
  %v1371 = vpop.f32.mrf.mxu0
  %v1372 = vadd.f32 %v691, %v1371
  %v1373 = vpop.f32.mrf.mxu0
  %v1374 = vadd.f32 %v691, %v1373
  %1375 = vdwg.mxu0
  %1376 = vmatpush.bf16.msra.mxu0 %v1162
  %1377 = vmatpush.bf16.msra.mxu0 %v1155
  %1378 = vmatpush.bf16.msra.mxu0 %v1148
  %1379 = vmatpush.bf16.msra.mxu0 %v1141
  %1380 = vmatpush.bf16.msra.mxu0 %v1134
  %1381 = vmatpush.bf16.msra.mxu0 %v1127
  %1382 = vmatpush.bf16.msra.mxu0 %v1120
  %1383 = vmatpush.bf16.msra.mxu0 %v1113
  %1384 = vmatmul.bf16.gmra.mxu0 %v557
  %v1385 = vpop.f32.mrf.mxu0
  %v1386 = vadd.f32 %v1372, %v1385
  %v1387 = vpop.f32.mrf.mxu0
  %v1388 = vadd.f32 %v1374, %v1387
  %1389 = vdwg.mxu0
  %1390 = vmatpush.bf16.msra.mxu0 %v1107
  %1391 = vmatpush.bf16.msra.mxu0 %v1100
  %1392 = vmatpush.bf16.msra.mxu0 %v1093
  %1393 = vmatpush.bf16.msra.mxu0 %v1086
  %1394 = vmatpush.bf16.msra.mxu0 %v1079
  %1395 = vmatpush.bf16.msra.mxu0 %v1072
  %1396 = vmatpush.bf16.msra.mxu0 %v1065
  %1397 = vmatpush.bf16.msra.mxu0 %v1058
  %1398 = vmatmul.bf16.gmra.mxu0 %v556
  %v1399 = vpop.f32.mrf.mxu0
  %v1400 = vadd.f32 %v692, %v1399
  %v1401 = vpop.f32.mrf.mxu0
  %v1402 = vadd.f32 %v692, %v1401
  %1403 = vdwg.mxu0
  %1404 = vmatpush.bf16.msra.mxu0 %v1163
  %1405 = vmatpush.bf16.msra.mxu0 %v1156
  %1406 = vmatpush.bf16.msra.mxu0 %v1149
  %1407 = vmatpush.bf16.msra.mxu0 %v1142
  %1408 = vmatpush.bf16.msra.mxu0 %v1135
  %1409 = vmatpush.bf16.msra.mxu0 %v1128
  %1410 = vmatpush.bf16.msra.mxu0 %v1121
  %1411 = vmatpush.bf16.msra.mxu0 %v1114
  %1412 = vmatmul.bf16.gmra.mxu0 %v557
  %v1413 = vpop.f32.mrf.mxu0
  %v1414 = vadd.f32 %v1400, %v1413
  %v1415 = vpop.f32.mrf.mxu0
  %v1416 = vadd.f32 %v1402, %v1415
  %1417 = vdwg.mxu0
  %1418 = vmatpush.bf16.msra.mxu0 %v1108
  %1419 = vmatpush.bf16.msra.mxu0 %v1101
  %1420 = vmatpush.bf16.msra.mxu0 %v1094
  %1421 = vmatpush.bf16.msra.mxu0 %v1087
  %1422 = vmatpush.bf16.msra.mxu0 %v1080
  %1423 = vmatpush.bf16.msra.mxu0 %v1073
  %1424 = vmatpush.bf16.msra.mxu0 %v1066
  %1425 = vmatpush.bf16.msra.mxu0 %v1059
  %1426 = vmatmul.bf16.gmra.mxu0 %v556
  %v1427 = vpop.f32.mrf.mxu0
  %v1428 = vadd.f32 %v693, %v1427
  %v1429 = vpop.f32.mrf.mxu0
  %v1430 = vadd.f32 %v693, %v1429
  %1431 = vdwg.mxu0
  %1432 = vmatpush.bf16.msra.mxu0 %v1164
  %1433 = vmatpush.bf16.msra.mxu0 %v1157
  %1434 = vmatpush.bf16.msra.mxu0 %v1150
  %1435 = vmatpush.bf16.msra.mxu0 %v1143
  %1436 = vmatpush.bf16.msra.mxu0 %v1136
  %1437 = vmatpush.bf16.msra.mxu0 %v1129
  %1438 = vmatpush.bf16.msra.mxu0 %v1122
  %1439 = vmatpush.bf16.msra.mxu0 %v1115
  %1440 = vmatmul.bf16.gmra.mxu0 %v557
  %v1441 = vpop.f32.mrf.mxu0
  %v1442 = vadd.f32 %v1428, %v1441
  %v1443 = vpop.f32.mrf.mxu0
  %v1444 = vadd.f32 %v1430, %v1443
  %1445 = vdwg.mxu0
  %1446 = vmatpush.bf16.msra.mxu0 %v1109
  %1447 = vmatpush.bf16.msra.mxu0 %v1102
  %1448 = vmatpush.bf16.msra.mxu0 %v1095
  %1449 = vmatpush.bf16.msra.mxu0 %v1088
  %1450 = vmatpush.bf16.msra.mxu0 %v1081
  %1451 = vmatpush.bf16.msra.mxu0 %v1074
  %1452 = vmatpush.bf16.msra.mxu0 %v1067
  %1453 = vmatpush.bf16.msra.mxu0 %v1060
  %1454 = vmatmul.bf16.gmra.mxu0 %v556
  %v1455 = vpop.f32.mrf.mxu0
  %v1456 = vadd.f32 %v694, %v1455
  %v1457 = vpop.f32.mrf.mxu0
  %v1458 = vadd.f32 %v694, %v1457
  %1459 = vdwg.mxu0
  %1460 = vmatpush.bf16.msra.mxu0 %v1165
  %1461 = vmatpush.bf16.msra.mxu0 %v1158
  %1462 = vmatpush.bf16.msra.mxu0 %v1151
  %1463 = vmatpush.bf16.msra.mxu0 %v1144
  %1464 = vmatpush.bf16.msra.mxu0 %v1137
  %1465 = vmatpush.bf16.msra.mxu0 %v1130
  %1466 = vmatpush.bf16.msra.mxu0 %v1123
  %1467 = vmatpush.bf16.msra.mxu0 %v1116
  %1468 = vmatmul.bf16.gmra.mxu0 %v557
  %v1469 = vpop.f32.mrf.mxu0
  %v1470 = vadd.f32 %v1456, %v1469
  %v1471 = vpop.f32.mrf.mxu0
  %v1472 = vadd.f32 %v1458, %v1471
  %1473 = vdwg.mxu0
  %v1474 = vpack.c.bf16 %v1330, %v1302
  %v1475 = vpack.c.bf16 %v1386, %v1358
  %v1476 = vpack.c.bf16 %v1442, %v1414
  %v1477 = vpack.c.bf16 %v1470, %v1470
  %v1478 = vpack.c.bf16 %v1332, %v1304
  %v1479 = vpack.c.bf16 %v1388, %v1360
  %v1480 = vpack.c.bf16 %v1444, %v1416
  %v1481 = vpack.c.bf16 %v1472, %v1472
  %1482 = vst [vmem:[%s7] sm:$0xff] %v1474
  %1483 = vst [vmem:[%s7 + $0x8] sm:$0xff] %v1475
  %1484 = vst [vmem:[%s7 + $0x10] sm:$0xff] %v1476
  %vm1485 = vcmask 125952
  %1486 = vst.msk [vmem:[%s7 + $0x18] sm:$0xf] %vm1485, %v1477
  %1487 = vst [vmem:[%s7 + $0x1c] sm:$0xff] %v1478
  %1488 = vst [vmem:[%s7 + $0x24] sm:$0xff] %v1479
  %1489 = vst [vmem:[%s7 + $0x2c] sm:$0xff] %v1480
  %1490 = vst.msk [vmem:[%s7 + $0x34] sm:$0xf] %vm1485, %v1481
  // Predicated region
  $region30: #{_forward_impl.1} parent=0 // pred_check
    _
  $region31: #{_forward_impl.1} parent=0 // pred_check_branch
    %1492 = sbr.rel (0) target = $region33
  $region32: #{_forward_impl.1} parent=0 // pred_region
    _
  $region33: #{_forward_impl.1} parent=0 // pred_fallthru
    _
  // Predicated region
  $region34: #{_forward_impl.1} parent=0 // pred_check
    _
  $region35: #{_forward_impl.1} parent=0 // pred_check_branch
    %1494 = sbr.rel (0) target = $region37
  $region36: #{_forward_impl.1} parent=0 // pred_region
    _
  $region37: #{_forward_impl.1} parent=0 // pred_fallthru
    _

</llo_original>
